<compile_context>
chip_gen: v7x
topology: tpu7x:2x2x1
jax: 0.10.0
libtpu: 0.0.40
codegen_flags: <defaults>
</compile_context>

<pallas_src>
import functools
import numpy as np

import jax
import jax.numpy as jnp
from jax.experimental import pallas as pl
from jax.experimental.pallas import tpu as pltpu

BN_EPS = 1e-5
VMEM_LIMIT = 32 * 1024 * 1024  # safe on v5e/v6e (128 MiB phys) and v7x (64 MiB phys)


# ----------------------------- helpers -----------------------------

def _round_up(x, m):
    return ((x + m - 1) // m) * m


# ----------------------------- Pallas kernels -----------------------------

def _mm_bias_kernel(a_ref, b_ref, bias_ref, o_ref, *, apply_relu):
    # Single full-K block: no reduction grid axis, no accumulator scratch.
    out = jnp.dot(a_ref[...], b_ref[...], preferred_element_type=jnp.float32)
    out = out + bias_ref[...]
    if apply_relu:
        out = jnp.maximum(out, 0.0)
    o_ref[...] = out.astype(o_ref.dtype)


def _mm_bias_res_kernel(a_ref, b_ref, bias_ref, res_ref, o_ref, *, apply_relu):
    # Fused residual-add (+ReLU) epilogue for the bottleneck conv3 / downsample path.
    out = jnp.dot(a_ref[...], b_ref[...], preferred_element_type=jnp.float32)
    out = out + bias_ref[...] + res_ref[...].astype(jnp.float32)
    if apply_relu:
        out = jnp.maximum(out, 0.0)
    o_ref[...] = out.astype(o_ref.dtype)


@functools.lru_cache(maxsize=None)
def _build_mm(Mp, Np, Kp, tm, tn, relu, out_dtype_name, has_res):
    out_dtype = jnp.dtype(out_dtype_name)
    grid = (Mp // tm, Np // tn)
    in_specs = [
        pl.BlockSpec((tm, Kp), lambda i, j: (i, 0)),
        pl.BlockSpec((Kp, tn), lambda i, j: (0, j)),
        pl.BlockSpec((1, tn), lambda i, j: (0, j)),
    ]
    if has_res:
        in_specs.append(pl.BlockSpec((tm, tn), lambda i, j: (i, j)))
        kern = functools.partial(_mm_bias_res_kernel, apply_relu=relu)
    else:
        kern = functools.partial(_mm_bias_kernel, apply_relu=relu)
    return pl.pallas_call(
        kern,
        out_shape=jax.ShapeDtypeStruct((Mp, Np), out_dtype),
        grid_spec=pltpu.PrefetchScalarGridSpec(
            num_scalar_prefetch=0,
            grid=grid,
            in_specs=in_specs,
            out_specs=pl.BlockSpec((tm, tn), lambda i, j: (i, j)),
        ),
        compiler_params=pltpu.CompilerParams(
            dimension_semantics=("parallel", "parallel"),
            vmem_limit_bytes=VMEM_LIMIT,
        ),
    )


def matmul_prepped(a, p, *, relu=False, out_dtype=jnp.float32, trim_n=True, residual=None):
    """(M,K) @ prepadded bf16 weight (Kp,Np) + bias [+residual], optional fused ReLU."""
    M, K = a.shape
    assert K == p["k"], (K, p["k"])
    Kp, Np = p["w"].shape
    # Small-M blocks are legal (block dim == full array dim), so no M padding below 128.
    tm = 128 if M >= 128 else M
    Mp = _round_up(M, tm)
    a_p = a.astype(jnp.bfloat16)
    if Mp != M or Kp != K:
        a_p = jnp.pad(a_p, ((0, Mp - M), (0, Kp - K)))
    args = [a_p, p["w"], p["b"]]
    has_res = residual is not None
    if has_res:
        r = residual.reshape(M, -1).astype(jnp.bfloat16)
        rn = r.shape[1]
        assert rn == p["n"], (rn, p["n"])
        if Mp != M or Np != rn:
            r = jnp.pad(r, ((0, Mp - M), (0, Np - rn)))
        args.append(r)
    out = _build_mm(Mp, Np, Kp, tm, p["tn"], bool(relu),
                    jnp.dtype(out_dtype).name, has_res)(*args)
    if Mp != M:
        out = out[:M]
    if trim_n and Np != p["n"]:
        out = out[:, :p["n"]]
    return out


def _max_reduce_kernel(x_ref, o_ref):
    o_ref[...] = jnp.max(x_ref[...], axis=0)


@functools.lru_cache(maxsize=None)
def _build_max_reduce(kk, R2, br, lanes, dtype_name):
    dt = jnp.dtype(dtype_name)
    return pl.pallas_call(
        _max_reduce_kernel,
        out_shape=jax.ShapeDtypeStruct((R2, lanes), dt),
        grid=(R2 // br,),
        in_specs=[pl.BlockSpec((kk, br, lanes), lambda i: (0, i, 0))],
        out_specs=pl.BlockSpec((br, lanes), lambda i: (i, 0)),
        compiler_params=pltpu.CompilerParams(
            dimension_semantics=("parallel",),
            vmem_limit_bytes=VMEM_LIMIT,
        ),
    )


def _softmax_kernel(x_ref, o_ref, *, valid_n):
    x = x_ref[...]
    cols = x.shape[1]
    tail_lo = (valid_n // 128) * 128          # static, lane-aligned
    if valid_n >= cols or tail_lo == 0:
        # fully valid (or tiny) row: mask (if needed) over the whole block
        if valid_n < cols:
            col = jax.lax.broadcasted_iota(jnp.int32, x.shape, 1)
            x = jnp.where(col < valid_n, x, -jnp.inf)
        m = jnp.max(x, axis=1, keepdims=True)
        e = jnp.exp(x - m)
        s = jnp.sum(e, axis=1, keepdims=True)
        o_ref[...] = (e * pl.reciprocal(s, approx=False)).astype(o_ref.dtype)
    else:
        # Mask only the tail tile; the main slab needs no compare/select work.
        main = x[:, :tail_lo]
        tail = x[:, tail_lo:]
        col = jax.lax.broadcasted_iota(jnp.int32, tail.shape, 1) + tail_lo
        tail = jnp.where(col < valid_n, tail, -jnp.inf)
        m = jnp.maximum(jnp.max(main, axis=1, keepdims=True),
                        jnp.max(tail, axis=1, keepdims=True))
        e_main = jnp.exp(main - m)
        e_tail = jnp.exp(tail - m)
        s = (jnp.sum(e_main, axis=1, keepdims=True) +
             jnp.sum(e_tail, axis=1, keepdims=True))
        r = pl.reciprocal(s, approx=False)
        o_ref[:, :tail_lo] = (e_main * r).astype(o_ref.dtype)
        o_ref[:, tail_lo:] = (e_tail * r).astype(o_ref.dtype)


@functools.lru_cache(maxsize=None)
def _build_softmax(Rp, cols, br, valid_n):
    return pl.pallas_call(
        functools.partial(_softmax_kernel, valid_n=valid_n),
        out_shape=jax.ShapeDtypeStruct((Rp, cols), jnp.float32),
        grid=(Rp // br,),
        in_specs=[pl.BlockSpec((br, cols), lambda i: (i, 0))],
        out_specs=pl.BlockSpec((br, cols), lambda i: (i, 0)),
        compiler_params=pltpu.CompilerParams(
            dimension_semantics=("parallel",),
            vmem_limit_bytes=VMEM_LIMIT,
        ),
    )


def softmax_masked(x, valid_n):
    """Row softmax over the first `valid_n` (lane-padded) columns, gridded over rows."""
    rows, cols = x.shape
    br = rows if rows <= 8 else 8
    Rp = _round_up(rows, br)
    if Rp != rows:
        x = jnp.pad(x, ((0, Rp - rows), (0, 0)))
    out = _build_softmax(Rp, cols, br, int(valid_n))(x)
    return out[:rows]


# ----------------------------- conv / pool wrappers -----------------------------

def conv2d(x, p, stride, padding, relu, residual=None):
    """NHWC conv via im2col (XLA glue) + Pallas matmul kernel (bf16 in, f32 acc).
    `residual` (NHWC, same shape as the output) is fused into the matmul epilogue."""
    # TODO(synk): at large image resolutions the im2col intermediates should be
    # replaced by an in-kernel patch gather; fine at the small sizes used here.
    n, h, w, c = x.shape
    kh, kw, cout = p["kh"], p["kw"], p["cout"]
    if padding:
        x = jnp.pad(x, ((0, 0), (padding, padding), (padding, padding), (0, 0)))
    oh = (h + 2 * padding - kh) // stride + 1
    ow = (w + 2 * padding - kw) // stride + 1
    cols = []
    for i in range(kh):
        for j in range(kw):
            cols.append(x[:, i:i + (oh - 1) * stride + 1:stride,
                          j:j + (ow - 1) * stride + 1:stride, :])
    patches = cols[0] if len(cols) == 1 else jnp.concatenate(cols, axis=-1)
    a = patches.reshape(n * oh * ow, kh * kw * c)
    res2d = None if residual is None else residual.reshape(n * oh * ow, cout)
    out = matmul_prepped(a, p, relu=relu, out_dtype=jnp.bfloat16, residual=res2d)
    return out.reshape(n, oh, ow, cout)


def maxpool2d(x, k=3, stride=2, padding=1):
    n, h, w, c = x.shape
    xp = jnp.pad(x, ((0, 0), (padding, padding), (padding, padding), (0, 0)),
                 constant_values=-jnp.inf)
    oh = (h + 2 * padding - k) // stride + 1
    ow = (w + 2 * padding - k) // stride + 1
    cols = []
    for i in range(k):
        for j in range(k):
            cols.append(xp[:, i:i + (oh - 1) * stride + 1:stride,
                           j:j + (ow - 1) * stride + 1:stride, :].reshape(1, -1))
    stacked = jnp.concatenate(cols, axis=0)            # (k*k, n*oh*ow*c)
    L = stacked.shape[1]
    LANES, br = 1024, 16                               # lane-dense output blocks
    Lp = _round_up(L, br * LANES)
    if Lp != L:
        stacked = jnp.pad(stacked, ((0, 0), (0, Lp - L)), constant_values=-jnp.inf)
    R2 = Lp // LANES
    stacked = stacked.reshape(k * k, R2, LANES)
    out = _build_max_reduce(k * k, R2, br, LANES, x.dtype.name)(stacked)
    return out.reshape(-1)[:L].reshape(n, oh, ow, c)


# ----------------------------- parameters (deterministic, pre-padded bf16) ------

def _prep_linear(w2d_f32, bias_f32):
    """Pad weight to (Kp, Np) and cast to bf16 ONCE; bias padded f32 (1, Np)."""
    K, N = w2d_f32.shape
    Kp = _round_up(K, 16)                # bf16 sublane granule; single full-K block per tile
    if N >= 16384:
        # 300 -> 100000 output layer: wide lane-dense tiles, 102400 = 8 * 12800
        tn = 12800
        Np = _round_up(N, tn)
    else:
        Np = _round_up(N, 128)
        tn = Np                          # single full-N block for conv/fc weights
        if Kp * Np * 2 >= (2 << 20) and Np % 256 == 0:
            tn = Np // 2                 # keep >=2 N blocks so both v7x TensorCores get work
    wp = jnp.pad(w2d_f32, ((0, Kp - K), (0, Np - N))).astype(jnp.bfloat16)
    bp = jnp.pad(bias_f32.reshape(1, N).astype(jnp.float32), ((0, 0), (0, Np - N)))
    return {"w": wp, "b": bp, "k": K, "n": N, "tn": tn}


def _conv_params(key, kh, kw, cin, cout):
    """He-init conv weight with inference BatchNorm (gamma=1, beta=0, mean=0, var=1)
    folded into the conv: w' = w * gamma/sqrt(var+eps), bias' = beta - mean*scale."""
    fan_in = kh * kw * cin
    w = jax.random.normal(key, (kh, kw, cin, cout), jnp.float32) * np.sqrt(2.0 / fan_in)
    scale = np.float32(1.0 / np.sqrt(1.0 + BN_EPS))
    w2d = (w * scale).reshape(fan_in, cout)
    d = _prep_linear(w2d, jnp.zeros((cout,), jnp.float32))
    d.update({"kh": kh, "kw": kw, "cin": cin, "cout": cout})
    return d


def make_params(key):
    keys = iter(jax.random.split(key, 128))
    p = {}
    p["conv1"] = _conv_params(next(keys), 7, 7, 3, 64)
    inplanes = 64
    stages = []
    for planes, nblocks, stride in [(64, 3, 1), (128, 4, 2), (256, 6, 2), (512, 3, 2)]:
        blocks = []
        for bidx in range(nblocks):
            s = stride if bidx == 0 else 1
            blk = {
                "conv1": _conv_params(next(keys), 1, 1, inplanes, planes),
                "conv2": _conv_params(next(keys), 3, 3, planes, planes),
                "conv3": _conv_params(next(keys), 1, 1, planes, planes * 4),
                "stride": s,
            }
            if s != 1 or inplanes != planes * 4:
                blk["down"] = _conv_params(next(keys), 1, 1, inplanes, planes * 4)
            blocks.append(blk)
            inplanes = planes * 4
        stages.append(blocks)
    p["stages"] = stages
    # ResNet-50 fc: 2048 -> 300 (num_classes=300)
    fc_w = jax.random.normal(next(keys), (2048, 300), jnp.float32) / np.sqrt(2048)
    p["fc"] = _prep_linear(fc_w, jnp.zeros((300,), jnp.float32))
    # Model_SoftMax.output_layer: 300 -> 100000
    out_w = jax.random.normal(next(keys), (300, 100000), jnp.float32) / np.sqrt(300)
    p["out"] = _prep_linear(out_w, jnp.zeros((100000,), jnp.float32))
    return p


# ----------------------------- forward -----------------------------

def forward(params, image_nchw):
    # NCHW (PyTorch convention) -> NHWC (kernel layout), bf16 activations
    x = jnp.transpose(image_nchw.astype(jnp.float32), (0, 2, 3, 1)).astype(jnp.bfloat16)

    x = conv2d(x, params["conv1"], stride=2, padding=3, relu=True)
    x = maxpool2d(x, 3, 2, 1)

    for blocks in params["stages"]:
        for blk in blocks:
            y = conv2d(x, blk["conv1"], 1, 0, relu=True)
            y = conv2d(y, blk["conv2"], blk["stride"], 1, relu=True)
            identity = (conv2d(x, blk["down"], blk["stride"], 0, relu=False)
                        if "down" in blk else x)
            # conv3 with the residual add + ReLU fused into the matmul epilogue
            x = conv2d(y, blk["conv3"], 1, 0, relu=True, residual=identity)

    # adaptive avg-pool to (1,1) + flatten (trivial JAX glue)
    feat = jnp.mean(x.astype(jnp.float32), axis=(1, 2))                     # (N, 2048)
    feat = matmul_prepped(feat, params["fc"], relu=False,
                          out_dtype=jnp.float32)                            # fc -> (N, 300)
    # Output layer: keep the lane-padded logits, mask inside softmax (no repad round-trip)
    logits_p = matmul_prepped(feat, params["out"], relu=False,
                              out_dtype=jnp.float32, trim_n=False)          # (N, 102400)
    probs_p = softmax_masked(logits_p, params["out"]["n"])                  # softmax over dim=1
    return probs_p[:, :params["out"]["n"]]                                  # (N, 100000)


if __name__ == "__main__":
    key = jax.random.PRNGKey(0)
    kp, kx = jax.random.split(key)
    params = make_params(kp)
    image = jax.random.normal(kx, (2, 3, 32, 32), jnp.float32)  # NCHW, like PyTorch
    out = forward(params, image)
    out = jax.block_until_ready(out)
    assert out.shape == (2, 100000), out.shape
    row_sums = np.asarray(jnp.sum(out, axis=1))
    assert np.allclose(row_sums, 1.0, atol=1e-3), row_sums
    print("KERNEL_OK")
</pallas_src>

<mosaic_0001>
module attributes {stable_mosaic.version = 11 : i64} {
  func.func @_mm_bias_kernel(%arg0: i32, %arg1: i32, %arg2: memref<128x160xbf16, #tpu.memory_space<vmem>>, %arg3: memref<160x128xbf16, #tpu.memory_space<vmem>>, %arg4: memref<1x128xf32, #tpu.memory_space<vmem>>, %arg5: memref<128x128xbf16, #tpu.memory_space<vmem>>) attributes {dimension_semantics = [#tpu.dimension_semantics<parallel>, #tpu.dimension_semantics<parallel>], iteration_bounds = array<i64: 4, 1>, scalar_prefetch = 0 : i64, scratch_operands = 0 : i64, tpu.core_type = #tpu.core_type<tc>, window_params = [{transform_indices = @transform_0, window_bounds = array<i64: 128, 160>}, {transform_indices = @transform_1, window_bounds = array<i64: 160, 128>}, {transform_indices = @transform_2, window_bounds = array<i64: 1, 128>}, {transform_indices = @transform_3, window_bounds = array<i64: 128, 128>}]} {
    %c0 = arith.constant 0 : index
    %c0_0 = arith.constant 0 : index
    %0 = vector.load %arg2[%c0, %c0_0] : memref<128x160xbf16, #tpu.memory_space<vmem>>, vector<128x160xbf16>
    %c0_1 = arith.constant 0 : index
    %c0_2 = arith.constant 0 : index
    %1 = vector.load %arg3[%c0_1, %c0_2] : memref<160x128xbf16, #tpu.memory_space<vmem>>, vector<160x128xbf16>
    %cst = arith.constant dense<0.000000e+00> : vector<128x128xf32>
    %2 = tpu.matmul %0, %1, %cst {dimension_numbers = #tpu.dot_dimension_numbers<[1], [0], [0], [1], [0, 0, 1, 1], [], []>} : vector<128x160xbf16>, vector<160x128xbf16>, vector<128x128xf32> -> vector<128x128xf32>
    %c0_3 = arith.constant 0 : index
    %c0_4 = arith.constant 0 : index
    %3 = vector.load %arg4[%c0_3, %c0_4] : memref<1x128xf32, #tpu.memory_space<vmem>>, vector<1x128xf32>
    %4 = vector.broadcast %3 : vector<1x128xf32> to vector<128x128xf32>
    %5 = arith.addf %2, %4 : vector<128x128xf32>
    %cst_5 = arith.constant 0.000000e+00 : f32
    %6 = vector.broadcast %cst_5 : f32 to vector<128x128xf32>
    %7 = arith.maximumf %5, %6 : vector<128x128xf32>
    %8 = arith.truncf %7 : vector<128x128xf32> to vector<128x128xbf16>
    %c0_6 = arith.constant 0 : index
    %c0_7 = arith.constant 0 : index
    %9 = vector.load %arg5[%c0_6, %c0_7] : memref<128x128xbf16, #tpu.memory_space<vmem>>, vector<128x128xbf16>
    tpu.vector_store %arg5[%c0_6, %c0_7], %8 {strides = array<i32>} : memref<128x128xbf16, #tpu.memory_space<vmem>>, vector<128x128xbf16>,
    return
  }
  func.func @transform_0(%arg0: i32, %arg1: i32) -> (i32, i32) {
    %c0_i32 = arith.constant 0 : i32
    %c0_i32_0 = arith.constant 0 : i32
    return %arg0, %c0_i32 : i32, i32
  }
  func.func @transform_1(%arg0: i32, %arg1: i32) -> (i32, i32) {
    %c0_i32 = arith.constant 0 : i32
    %c0_i32_0 = arith.constant 0 : i32
    return %c0_i32, %arg1 : i32, i32
  }
  func.func @transform_2(%arg0: i32, %arg1: i32) -> (i32, i32) {
    %c0_i32 = arith.constant 0 : i32
    %c0_i32_0 = arith.constant 0 : i32
    return %c0_i32, %arg1 : i32, i32
  }
  func.func @transform_3(%arg0: i32, %arg1: i32) -> (i32, i32) {
    %c0_i32 = arith.constant 0 : i32
    return %arg0, %arg1 : i32, i32
  }
}

</mosaic_0001>

<llo_original>
// kernel: tpu_custom_call.1
$region0: #{tpu_custom_call.1}
  #allocation0 [shape = 'u32[]', space=smem, size = 0x4, offset = 0x4, fixed_abs, tag = 'smem constant byte address 0x4 - core index']
  #allocation1 [shape = 'u32[144,128]{1,0:T(1,128)}', space=vmem, size = 0x12000, scoped, tag = 'internal scratch']
  %s0 = inlined_call_operand.vmem [shape: bf16[512,160], index: 0, kind: input, shape index: {}]
  %s1 = inlined_call_operand.vmem [shape: bf16[160,128], index: 1, kind: input, shape index: {}]
  %s2 = inlined_call_operand.vmem [shape: f32[1,128], index: 2, kind: input, shape index: {}]
  %s3 = inlined_call_operand.hbm [shape: bf16[512,128], index: 3, kind: output, shape index: {}]
  %s4 = sld [smem:[#allocation0]]
  $region45: #{tpu_custom_call.1} parent=0
    _
  %s6 = ssub.s32 1, %s4
  %s7 = scalar_select 0, %s6, %s4
  $region1: #{tpu_custom_call.1} parent=0
    #allocation2 [shape = 'u8[65536]{0}', space=vmem, size = 0x10000, scoped, tag = 'output window, operand 0']
    #allocation3 [shape = 's32[2]{0}', space=sflag, size = 0x8, scoped, tag = 'scoped memory for tpu_custom_call.1']
    %8 = vsyncpa [#allocation3], 0
    %s9 = scalar_lea.sflag [#allocation3], 1
    %10 = vsyncpa %s9, 0
    loop: start=0, step=1, limit=6
    $region2: #{tpu_custom_call.1} parent=1 // loop_pre_header
      _
    $region3: #{tpu_custom_call.1} parent=1 // loop_header
      %s12 = sphi 0, %s16
      %p13 = scmp.ge.s32.totalorder %s12, 6
      %s19 = sphi 0, %s31
      %s20 = sphi 0, %s27
      %s21 = sphi 0, %s19
      %s22 = sphi 0, %s20
      %s23 = sphi 0, %s21
      %s24 = sphi 0, %s22
      %s34 = sphi 0, %s36
      %s37 = sphi 0, %s34
      %s38 = sphi 0, %s37
      %s54 = sphi 0, %s38
      %s60 = sphi 0, %s62
      %s63 = sphi 0, %s60
      %s64 = sphi 0, %s63
      %s80 = sphi 0, %s64
      %s86 = sphi 0, %s88
      %s89 = sphi 0, %s86
      %s90 = sphi 0, %s89
      %s106 = sphi 0, %s90
      %s114 = sphi 0, %s116
      %s117 = sphi 0, %s114
      %s118 = sphi 0, %s117
      %s134 = sphi 0, %s118
    $region4: #{tpu_custom_call.1} parent=1 // loop_header_branch
      %15 = sbr.rel (%p13) target = $region8
    $region5: #{tpu_custom_call.1} parent=1 // loop_body
      %s17 = ssub.s32 %s12, 1
      %s18 = ssub.s32 %s12, 2
      %s25 = sadd.s32 1, %s20
      %p26 = scmp.ge.s32.totalorder %s25, 1
      %s27 = scalar_select %p26, 0, %s25
      %s28 = sadd.s32 1, %s19
      %s29 = scalar_select %p26, %s28, %s19
      %p30 = scmp.ge.s32.totalorder %s29, 4
      %s31 = scalar_select %p30, 0, %s29
      %s32 = ssub.s32 %s19, %s31
      %p33 = scmp.eq.s32.totalorder %s32, 0
      %s35 = sadd.s32 %s34, 1
      %s36 = scalar_select %p33, %s34, %s35
      %p39 = pneg %p33
      %p40 = scmp.eq.s32.totalorder %s12, 3
      %p41 = por %p39, %p40
      %p42 = scmp.ne.s32.totalorder %s34, %s37
      %p43 = scmp.eq.s32.totalorder %s12, 0
      %p44 = por %p42, %p43
      %p45 = scmp.ne.s32.totalorder %s34, %s37
      %p46 = scmp.eq.s32.totalorder %s17, 3
      %p47 = por %p45, %p46
      %p48 = scmp.ne.s32.totalorder %s37, %s38
      %p49 = scmp.eq.s32.totalorder %s17, 0
      %p50 = por %p48, %p49
      %p51 = scmp.ne.s32.totalorder %s37, %s38
      %p52 = scmp.eq.s32.totalorder %s18, 3
      %p53 = por %p51, %p52
      %p55 = scmp.ne.s32.totalorder %s38, %s54
      %p56 = scmp.eq.s32.totalorder %s18, 0
      %p57 = por %p55, %p56
      %s58 = ssub.s32 %s20, %s27
      %p59 = scmp.eq.s32.totalorder %s58, 0
      %s61 = sadd.s32 %s60, 1
      %s62 = scalar_select %p59, %s60, %s61
      %p65 = pneg %p59
      %p66 = scmp.eq.s32.totalorder %s12, 3
      %p67 = por %p65, %p66
      %p68 = scmp.ne.s32.totalorder %s60, %s63
      %p69 = scmp.eq.s32.totalorder %s12, 0
      %p70 = por %p68, %p69
      %p71 = scmp.ne.s32.totalorder %s60, %s63
      %p72 = scmp.eq.s32.totalorder %s17, 3
      %p73 = por %p71, %p72
      %p74 = scmp.ne.s32.totalorder %s63, %s64
      %p75 = scmp.eq.s32.totalorder %s17, 0
      %p76 = por %p74, %p75
      %p77 = scmp.ne.s32.totalorder %s63, %s64
      %p78 = scmp.eq.s32.totalorder %s18, 3
      %p79 = por %p77, %p78
      %p81 = scmp.ne.s32.totalorder %s64, %s80
      %p82 = scmp.eq.s32.totalorder %s18, 0
      %p83 = por %p81, %p82
      %s84 = ssub.s32 %s20, %s27
      %p85 = scmp.eq.s32.totalorder %s84, 0
      %s87 = sadd.s32 %s86, 1
      %s88 = scalar_select %p85, %s86, %s87
      %p91 = pneg %p85
      %p92 = scmp.eq.s32.totalorder %s12, 3
      %p93 = por %p91, %p92
      %p94 = scmp.ne.s32.totalorder %s86, %s89
      %p95 = scmp.eq.s32.totalorder %s12, 0
      %p96 = por %p94, %p95
      %p97 = scmp.ne.s32.totalorder %s86, %s89
      %p98 = scmp.eq.s32.totalorder %s17, 3
      %p99 = por %p97, %p98
      %p100 = scmp.ne.s32.totalorder %s89, %s90
      %p101 = scmp.eq.s32.totalorder %s17, 0
      %p102 = por %p100, %p101
      %p103 = scmp.ne.s32.totalorder %s89, %s90
      %p104 = scmp.eq.s32.totalorder %s18, 3
      %p105 = por %p103, %p104
      %p107 = scmp.ne.s32.totalorder %s90, %s106
      %p108 = scmp.eq.s32.totalorder %s18, 0
      %p109 = por %p107, %p108
      %s110 = ssub.s32 %s19, %s31
      %s111 = ssub.s32 %s20, %s27
      %s112 = sor.u32 %s110, %s111
      %p113 = scmp.eq.s32.totalorder %s112, 0
      %s115 = sadd.s32 %s114, 1
      %s116 = scalar_select %p113, %s114, %s115
      %p119 = pneg %p113
      %p120 = scmp.eq.s32.totalorder %s12, 3
      %p121 = por %p119, %p120
      %p122 = scmp.ne.s32.totalorder %s114, %s117
      %p123 = scmp.eq.s32.totalorder %s12, 0
      %p124 = por %p122, %p123
      %p125 = scmp.ne.s32.totalorder %s114, %s117
      %p126 = scmp.eq.s32.totalorder %s17, 3
      %p127 = por %p125, %p126
      %p128 = scmp.ne.s32.totalorder %s117, %s118
      %p129 = scmp.eq.s32.totalorder %s17, 0
      %p130 = por %p128, %p129
      %p131 = scmp.ne.s32.totalorder %s117, %s118
      %p132 = scmp.eq.s32.totalorder %s18, 3
      %p133 = por %p131, %p132
      %p135 = scmp.ne.s32.totalorder %s118, %s134
      %p136 = scmp.eq.s32.totalorder %s18, 0
      %p137 = por %p135, %p136
      %p138 = scmp.le.s32.totalorder 1, %s12
      %p139 = scmp.lt.s32.totalorder %s12, 5
      %p140 = pnand %p138, %p139
      %p141 = pneg %p140
      // Predicated region
      $region9: #{tpu_custom_call.1} parent=5 // pred_check
        _
      $region10: #{tpu_custom_call.1} parent=5 // pred_check_branch
        %143 = sbr.rel (%p140) target = $region12
      $region11: #{tpu_custom_call.1} parent=5 // pred_region
        %s144 = ssub.s32 %s12, 1
        // Predicated region
        $region13: #{tpu_custom_call.1} parent=11 // pred_check
          %p145 = pneg %p76
        $region14: #{tpu_custom_call.1} parent=11 // pred_check_branch
          %147 = sbr.rel (%p145) target = $region16
        $region15: #{tpu_custom_call.1} parent=11 // pred_region
          %p148 = scmp.lt.s32.totalorder %s22, 0
          %s149 = scalar_select %p148, %s22, 0
          %s150 = smul.addr %s149, 4
          %s151 = scalar_lea.vmem %s1, %s150
        $region16: #{tpu_custom_call.1} parent=11 // pred_fallthru
          _
        // Predicated region
        $region17: #{tpu_custom_call.1} parent=11 // pred_check
          %p152 = pneg %p102
        $region18: #{tpu_custom_call.1} parent=11 // pred_check_branch
          %154 = sbr.rel (%p152) target = $region20
        $region19: #{tpu_custom_call.1} parent=11 // pred_region
          %p155 = scmp.lt.s32.totalorder %s22, 0
          %s156 = scalar_select %p155, %s22, 0
          %s157 = scalar_lea.vmem %s2, %s156
        $region20: #{tpu_custom_call.1} parent=11 // pred_fallthru
          _
      $region12: #{tpu_custom_call.1} parent=5 // pred_fallthru
        _
      %p158 = scmp.lt.s32.totalorder %s12, 4
      // Predicated region
      $region21: #{tpu_custom_call.1} parent=5 // pred_check
        %p159 = pneg %p158
      $region22: #{tpu_custom_call.1} parent=5 // pred_check_branch
        %161 = sbr.rel (%p159) target = $region24
      $region23: #{tpu_custom_call.1} parent=5 // pred_region
        // Predicated region
        $region25: #{tpu_custom_call.1} parent=23 // pred_check
          %p162 = pneg %p44
        $region26: #{tpu_custom_call.1} parent=23 // pred_check_branch
          %164 = sbr.rel (%p162) target = $region28
        $region27: #{tpu_custom_call.1} parent=23 // pred_region
          %s165 = smul.u32 16, %s19
          %p166 = scmp.lt.s32.totalorder %s165, 63
          %s167 = scalar_select %p166, %s165, 63
          %s168 = smul.addr %s167, 2
          %s169 = smul.addr %s168, 4
          %s170 = scalar_lea.vmem %s0, %s169
          %s171 = smul.u32 16, %s19
        $region28: #{tpu_custom_call.1} parent=23 // pred_fallthru
          _
      $region24: #{tpu_custom_call.1} parent=5 // pred_fallthru
        _
      %p172 = scmp.le.s32.totalorder 1, %s12
      %p173 = scmp.lt.s32.totalorder %s12, 5
      %p174 = pnand %p172, %p173
      %p175 = pneg %p174
      // Predicated region
      $region29: #{tpu_custom_call.1} parent=5 // pred_check
        _
      $region30: #{tpu_custom_call.1} parent=5 // pred_check_branch
        %177 = sbr.rel (%p174) target = $region32
      $region31: #{tpu_custom_call.1} parent=5 // pred_region
        %s178 = ssub.s32 %s12, 1
        %s179 = smul.u32 16, %s21
        %p180 = scmp.lt.s32.totalorder %s179, 63
        %s181 = scalar_select %p180, %s179, 63
        %s182 = smul.addr %s181, 2
        %s183 = smul.addr %s182, 4
        %s184 = scalar_lea.vmem %s0, %s183
        %p185 = pneg %p50
        %p186 = pneg %p47
        %p187 = scmp.lt.s32.totalorder %s22, 0
        %s188 = scalar_select %p187, %s22, 0
        %s189 = smul.addr %s188, 4
        %s190 = scalar_lea.vmem %s1, %s189
        %p191 = pneg %p76
        %p192 = pneg %p73
        %p193 = scmp.lt.s32.totalorder %s22, 0
        %s194 = scalar_select %p193, %s22, 0
        %s195 = scalar_lea.vmem %s2, %s194
        %p196 = pneg %p102
        %p197 = pneg %p99
        %p198 = pneg %p130
        %p199 = pneg %p127
        %s200 = sand.u32 %s117, 1
        %s201 = scalar_lea.sflag [#allocation3], %s200
        %s202 = sand.u32 %s117, 1
        %s203 = smul.addr %s202, 64
        %s204 = scalar_lea.vmem [#allocation2], %s203
        %s205 = smul.u32 16, %s21
        %p206 = scmp.lt.s32.totalorder %s205, 63
        %s207 = scalar_select %p206, %s205, 63
        %s208 = smul.addr %s207, 2
        %s209 = smul.addr %s208, 4
        %s210 = scalar_lea.vmem %s0, %s209
        %s211 = smul.u32 16, %s21
        %p212 = scmp.lt.s32.totalorder %s22, 0
        %s213 = scalar_select %p212, %s22, 0
        %s214 = smul.addr %s213, 4
        %s215 = scalar_lea.vmem %s1, %s214
        %p216 = scmp.lt.s32.totalorder %s22, 0
        %s217 = scalar_select %p216, %s22, 0
        %s218 = scalar_lea.vmem %s2, %s217
        %s219 = smul.u32 16, %s21
        %v221 = vld [vmem:[%s210] sm:$0xff]
        %v222 = vld [vmem:[%s210 + $0x8] sm:$0xff]
        %v223 = vld [vmem:[%s210 + $0x10] sm:$0xff]
        %v224 = vld [vmem:[%s210 + $0x18] sm:$0xff]
        %v225 = vld [vmem:[%s210 + $0x20] sm:$0xff]
        %v226 = vld [vmem:[%s210 + $0x28] sm:$0xff]
        %v227 = vld [vmem:[%s210 + $0x30] sm:$0xff]
        %v228 = vld [vmem:[%s210 + $0x38] sm:$0xff]
        %v229 = vld [vmem:[%s210 + $0x40] sm:$0xff]
        %v230 = vld [vmem:[%s210 + $0x48] sm:$0xff]
        %v231 = vld [vmem:[%s210 + $0x50] sm:$0xff]
        %v232 = vld [vmem:[%s210 + $0x58] sm:$0xff]
        %v233 = vld [vmem:[%s210 + $0x60] sm:$0xff]
        %v234 = vld [vmem:[%s210 + $0x68] sm:$0xff]
        %v235 = vld [vmem:[%s210 + $0x70] sm:$0xff]
        %v236 = vld [vmem:[%s210 + $0x78] sm:$0xff]
        %v237 = vld [vmem:[%s215] sm:$0xf]
        %v238 = vld [vmem:[%s215 + $0x4] sm:$0xf]
        %v239 = vld [vmem:[%s215 + $0x8] sm:$0xf]
        %v240 = vld [vmem:[%s215 + $0xc] sm:$0xf]
        %v241 = vld [vmem:[%s215 + $0x10] sm:$0xf]
        %v242 = vld [vmem:[%s215 + $0x14] sm:$0xf]
        %v243 = vld [vmem:[%s215 + $0x18] sm:$0xf]
        %v244 = vld [vmem:[%s215 + $0x1c] sm:$0xf]
        %v245 = vld [vmem:[%s215 + $0x20] sm:$0xf]
        %v246 = vld [vmem:[%s215 + $0x24] sm:$0xf]
        %v247 = vld [vmem:[%s215 + $0x28] sm:$0xf]
        %v248 = vld [vmem:[%s215 + $0x2c] sm:$0xf]
        %v249 = vld [vmem:[%s215 + $0x30] sm:$0xf]
        %v250 = vld [vmem:[%s215 + $0x34] sm:$0xf]
        %v251 = vld [vmem:[%s215 + $0x38] sm:$0xf]
        %v252 = vld [vmem:[%s215 + $0x3c] sm:$0xf]
        %v253 = vld [vmem:[%s215 + $0x40] sm:$0xf]
        %v254 = vld [vmem:[%s215 + $0x44] sm:$0xf]
        %v255 = vld [vmem:[%s215 + $0x48] sm:$0xf]
        %v256 = vld [vmem:[%s215 + $0x4c] sm:$0xf]
        %v257 = vld [vmem:[%s218] sm:$0x1]
        %v259 = vlaneseq
        %v260 = vshrl.u32 %v259, 7
        %v261 = vsub.s32 0, %v260
        %v262 = vrot.slane %v257, %v261
        %v280 = vunpack.c.l.b16 %v221
        %v281 = vunpack.c.h.b16 %v221
        %v282 = vunpack.c.l.b16 %v222
        %v283 = vunpack.c.h.b16 %v222
        %v284 = vunpack.c.l.b16 %v223
        %v285 = vunpack.c.h.b16 %v223
        %v286 = vunpack.c.l.b16 %v224
        %v287 = vunpack.c.h.b16 %v224
        %v288 = vunpack.c.l.b16 %v225
        %v289 = vunpack.c.h.b16 %v225
        %v290 = vunpack.c.l.b16 %v226
        %v291 = vunpack.c.h.b16 %v226
        %v292 = vunpack.c.l.b16 %v227
        %v293 = vunpack.c.h.b16 %v227
        %v294 = vunpack.c.l.b16 %v228
        %v295 = vunpack.c.h.b16 %v228
        %v296 = vunpack.c.l.b16 %v229
        %v297 = vunpack.c.h.b16 %v229
        %v298 = vunpack.c.l.b16 %v230
        %v299 = vunpack.c.h.b16 %v230
        %v300 = vunpack.c.l.b16 %v231
        %v301 = vunpack.c.h.b16 %v231
        %v302 = vunpack.c.l.b16 %v232
        %v303 = vunpack.c.h.b16 %v232
        %v304 = vunpack.c.l.b16 %v233
        %v305 = vunpack.c.h.b16 %v233
        %v306 = vunpack.c.l.b16 %v234
        %v307 = vunpack.c.h.b16 %v234
        %v308 = vunpack.c.l.b16 %v235
        %v309 = vunpack.c.h.b16 %v235
        %v310 = vunpack.c.l.b16 %v236
        %v311 = vunpack.c.h.b16 %v236
        %v312 = vpack.c.b16 %v282, %v280
        %v313 = vpack.c.b16 %v283, %v281
        %v314 = vpack.c.b16 %v286, %v284
        %v315 = vpack.c.b16 %v287, %v285
        %v316 = vpack.c.b16 %v290, %v288
        %v317 = vpack.c.b16 %v291, %v289
        %v318 = vpack.c.b16 %v294, %v292
        %v319 = vpack.c.b16 %v295, %v293
        %v320 = vpack.c.b16 %v298, %v296
        %v321 = vpack.c.b16 %v299, %v297
        %v322 = vpack.c.b16 %v302, %v300
        %v323 = vpack.c.b16 %v303, %v301
        %v324 = vpack.c.b16 %v306, %v304
        %v325 = vpack.c.b16 %v307, %v305
        %v326 = vpack.c.b16 %v310, %v308
        %v327 = vpack.c.b16 %v311, %v309
        %v356 = vunpack.c.l.b16 %v237
        %v357 = vunpack.c.l.b16 %v238
        %v358 = vunpack.c.l.b16 %v239
        %v359 = vunpack.c.l.b16 %v240
        %v360 = vunpack.c.l.b16 %v241
        %v361 = vunpack.c.l.b16 %v242
        %v362 = vunpack.c.l.b16 %v243
        %v363 = vunpack.c.l.b16 %v244
        %v364 = vunpack.c.l.b16 %v245
        %v365 = vunpack.c.l.b16 %v246
        %v366 = vunpack.c.l.b16 %v247
        %v367 = vunpack.c.l.b16 %v248
        %v368 = vunpack.c.l.b16 %v249
        %v369 = vunpack.c.l.b16 %v250
        %v370 = vunpack.c.l.b16 %v251
        %v371 = vunpack.c.l.b16 %v252
        %v372 = vunpack.c.l.b16 %v253
        %v373 = vunpack.c.l.b16 %v254
        %v374 = vunpack.c.l.b16 %v255
        %v375 = vunpack.c.l.b16 %v256
        %v376 = vpack.c.b16 %v357, %v356
        %v377 = vpack.c.b16 %v359, %v358
        %v378 = vpack.c.b16 %v361, %v360
        %v379 = vpack.c.b16 %v363, %v362
        %v380 = vpack.c.b16 %v365, %v364
        %v381 = vpack.c.b16 %v367, %v366
        %v382 = vpack.c.b16 %v369, %v368
        %v383 = vpack.c.b16 %v371, %v370
        %v384 = vpack.c.b16 %v373, %v372
        %v385 = vpack.c.b16 %v375, %v374
        %vm396 = vcmask 261120
        %v398 = vsel %vm396, %v313, 0
        %v401 = vsel %vm396, %v315, 0
        %v404 = vsel %vm396, %v317, 0
        %v407 = vsel %vm396, %v319, 0
        %v410 = vsel %vm396, %v321, 0
        %v413 = vsel %vm396, %v323, 0
        %v416 = vsel %vm396, %v325, 0
        %v419 = vsel %vm396, %v327, 0
        %421 = vmatprep.subr.bf16.mxu0 0
        %422 = vmatpush1.bf16.msra.mxu0 %v376
        %423 = vmatprep.subr.bf16.mxu0 0
        %424 = vmatpush1.bf16.msra.mxu0 %v377
        %425 = vmatprep.subr.bf16.mxu0 0
        %426 = vmatpush1.bf16.msra.mxu0 %v378
        %427 = vmatprep.subr.bf16.mxu0 0
        %428 = vmatpush1.bf16.msra.mxu0 %v379
        %429 = vmatprep.subr.bf16.mxu0 0
        %430 = vmatpush1.bf16.msra.mxu0 %v380
        %431 = vmatprep.subr.bf16.mxu0 0
        %432 = vmatpush1.bf16.msra.mxu0 %v381
        %433 = vmatprep.subr.bf16.mxu0 0
        %434 = vmatpush1.bf16.msra.mxu0 %v382
        %435 = vmatprep.subr.bf16.mxu0 0
        %436 = vmatpush1.bf16.msra.mxu0 %v383
        %437 = vmatprep.subr.bf16.mxu0 0
        %438 = vmatpush1.bf16.msra.mxu0 %v384
        %439 = vmatprep.subr.bf16.mxu0 0
        %440 = vmatpush1.bf16.msra.mxu0 %v385
        %441 = vmatprep.subr.bf16.mxu0 0
        %442 = vmatpush1.bf16.msra.mxu0 0
        %443 = vmatprep.subr.bf16.mxu0 0
        %444 = vmatpush1.bf16.msra.mxu0 0
        %445 = vmatprep.subr.bf16.mxu0 0
        %446 = vmatpush1.bf16.msra.mxu0 0
        %447 = vmatprep.subr.bf16.mxu0 0
        %448 = vmatpush1.bf16.msra.mxu0 0
        %449 = vmatprep.subr.bf16.mxu0 0
        %450 = vmatpush1.bf16.msra.mxu0 0
        %451 = vmatprep.subr.bf16.mxu0 0
        %452 = vmatpush1.bf16.msra.mxu0 0
        %453 = vmatprep.mubr.bf16.mxu0 %v398
        %454 = vmatmul.mubr.bf16.gmra.mrb[0].mxu0 %v312
        %v455 = vpop.f32.mrb[0].mxu0
        %v456 = vadd.f32 %v262, %v455
        %v457 = vpop.f32.mrb[0].mxu0
        %v458 = vpop.f32.mrb[0].mxu0
        %v459 = vadd.f32 %v262, %v458
        %v460 = vpop.f32.mrb[0].mxu0
        %461 = vmatprep.mubr.bf16.mxu0 %v401
        %462 = vmatmul.mubr.bf16.gmra.mrb[0].mxu0 %v314
        %v463 = vpop.f32.mrb[0].mxu0
        %v464 = vadd.f32 %v262, %v463
        %v465 = vpop.f32.mrb[0].mxu0
        %v466 = vpop.f32.mrb[0].mxu0
        %v467 = vadd.f32 %v262, %v466
        %v468 = vpop.f32.mrb[0].mxu0
        %469 = vmatprep.mubr.bf16.mxu0 %v404
        %470 = vmatmul.mubr.bf16.gmra.mrb[0].mxu0 %v316
        %v471 = vpop.f32.mrb[0].mxu0
        %v472 = vadd.f32 %v262, %v471
        %v473 = vpop.f32.mrb[0].mxu0
        %v474 = vpop.f32.mrb[0].mxu0
        %v475 = vadd.f32 %v262, %v474
        %v476 = vpop.f32.mrb[0].mxu0
        %477 = vmatprep.mubr.bf16.mxu0 %v407
        %478 = vmatmul.mubr.bf16.gmra.mrb[0].mxu0 %v318
        %v479 = vpop.f32.mrb[0].mxu0
        %v480 = vadd.f32 %v262, %v479
        %v481 = vpop.f32.mrb[0].mxu0
        %v482 = vpop.f32.mrb[0].mxu0
        %v483 = vadd.f32 %v262, %v482
        %v484 = vpop.f32.mrb[0].mxu0
        %485 = vmatprep.mubr.bf16.mxu0 %v410
        %486 = vmatmul.mubr.bf16.gmra.mrb[0].mxu0 %v320
        %v487 = vpop.f32.mrb[0].mxu0
        %v488 = vadd.f32 %v262, %v487
        %v489 = vpop.f32.mrb[0].mxu0
        %v490 = vpop.f32.mrb[0].mxu0
        %v491 = vadd.f32 %v262, %v490
        %v492 = vpop.f32.mrb[0].mxu0
        %493 = vmatprep.mubr.bf16.mxu0 %v413
        %494 = vmatmul.mubr.bf16.gmra.mrb[0].mxu0 %v322
        %v495 = vpop.f32.mrb[0].mxu0
        %v496 = vadd.f32 %v262, %v495
        %v497 = vpop.f32.mrb[0].mxu0
        %v498 = vpop.f32.mrb[0].mxu0
        %v499 = vadd.f32 %v262, %v498
        %v500 = vpop.f32.mrb[0].mxu0
        %501 = vmatprep.mubr.bf16.mxu0 %v416
        %502 = vmatmul.mubr.bf16.gmra.mrb[0].mxu0 %v324
        %v503 = vpop.f32.mrb[0].mxu0
        %v504 = vadd.f32 %v262, %v503
        %v505 = vpop.f32.mrb[0].mxu0
        %v506 = vpop.f32.mrb[0].mxu0
        %v507 = vadd.f32 %v262, %v506
        %v508 = vpop.f32.mrb[0].mxu0
        %509 = vmatprep.mubr.bf16.mxu0 %v419
        %510 = vmatmul.mubr.bf16.gmra.mrb[0].mxu0 %v326
        %v511 = vpop.f32.mrb[0].mxu0
        %v512 = vadd.f32 %v262, %v511
        %v513 = vpop.f32.mrb[0].mxu0
        %v514 = vpop.f32.mrb[0].mxu0
        %v515 = vadd.f32 %v262, %v514
        %v516 = vpop.f32.mrb[0].mxu0
        %517 = vdwg.mxu0
        %v518 = vmax.f32 %v456, 0.0
        %v519 = vmax.f32 %v459, 0.0
        %v520 = vmax.f32 %v464, 0.0
        %v521 = vmax.f32 %v467, 0.0
        %v522 = vmax.f32 %v472, 0.0
        %v523 = vmax.f32 %v475, 0.0
        %v524 = vmax.f32 %v480, 0.0
        %v525 = vmax.f32 %v483, 0.0
        %v526 = vmax.f32 %v488, 0.0
        %v527 = vmax.f32 %v491, 0.0
        %v528 = vmax.f32 %v496, 0.0
        %v529 = vmax.f32 %v499, 0.0
        %v530 = vmax.f32 %v504, 0.0
        %v531 = vmax.f32 %v507, 0.0
        %v532 = vmax.f32 %v512, 0.0
        %v533 = vmax.f32 %v515, 0.0
        %v534 = vpack.c.bf16 %v519, %v518
        %v535 = vpack.c.bf16 %v521, %v520
        %v536 = vpack.c.bf16 %v523, %v522
        %v537 = vpack.c.bf16 %v525, %v524
        %v538 = vpack.c.bf16 %v527, %v526
        %v539 = vpack.c.bf16 %v529, %v528
        %v540 = vpack.c.bf16 %v531, %v530
        %v541 = vpack.c.bf16 %v533, %v532
        %v550 = vunpack.c.l.b16 %v534
        %v551 = vunpack.c.h.b16 %v534
        %v552 = vunpack.c.l.b16 %v535
        %v553 = vunpack.c.h.b16 %v535
        %v554 = vunpack.c.l.b16 %v536
        %v555 = vunpack.c.h.b16 %v536
        %v556 = vunpack.c.l.b16 %v537
        %v557 = vunpack.c.h.b16 %v537
        %v558 = vunpack.c.l.b16 %v538
        %v559 = vunpack.c.h.b16 %v538
        %v560 = vunpack.c.l.b16 %v539
        %v561 = vunpack.c.h.b16 %v539
        %v562 = vunpack.c.l.b16 %v540
        %v563 = vunpack.c.h.b16 %v540
        %v564 = vunpack.c.l.b16 %v541
        %v565 = vunpack.c.h.b16 %v541
        %v566 = vpack.c.b16 %v550, %v550
        %v567 = vpack.c.b16 %v551, %v551
        %v568 = vpack.c.b16 %v552, %v552
        %v569 = vpack.c.b16 %v553, %v553
        %v570 = vpack.c.b16 %v554, %v554
        %v571 = vpack.c.b16 %v555, %v555
        %v572 = vpack.c.b16 %v556, %v556
        %v573 = vpack.c.b16 %v557, %v557
        %v574 = vpack.c.b16 %v558, %v558
        %v575 = vpack.c.b16 %v559, %v559
        %v576 = vpack.c.b16 %v560, %v560
        %v577 = vpack.c.b16 %v561, %v561
        %v578 = vpack.c.b16 %v562, %v562
        %v579 = vpack.c.b16 %v563, %v563
        %v580 = vpack.c.b16 %v564, %v564
        %v581 = vpack.c.b16 %v565, %v565
        %598 = vst [vmem:[%s204] sm:$0xf] %v566
        %599 = vst [vmem:[%s204 + $0x4] sm:$0xf] %v567
        %600 = vst [vmem:[%s204 + $0x8] sm:$0xf] %v568
        %601 = vst [vmem:[%s204 + $0xc] sm:$0xf] %v569
        %602 = vst [vmem:[%s204 + $0x10] sm:$0xf] %v570
        %603 = vst [vmem:[%s204 + $0x14] sm:$0xf] %v571
        %604 = vst [vmem:[%s204 + $0x18] sm:$0xf] %v572
        %605 = vst [vmem:[%s204 + $0x1c] sm:$0xf] %v573
        %606 = vst [vmem:[%s204 + $0x20] sm:$0xf] %v574
        %607 = vst [vmem:[%s204 + $0x24] sm:$0xf] %v575
        %608 = vst [vmem:[%s204 + $0x28] sm:$0xf] %v576
        %609 = vst [vmem:[%s204 + $0x2c] sm:$0xf] %v577
        %610 = vst [vmem:[%s204 + $0x30] sm:$0xf] %v578
        %611 = vst [vmem:[%s204 + $0x34] sm:$0xf] %v579
        %612 = vst [vmem:[%s204 + $0x38] sm:$0xf] %v580
        %613 = vst [vmem:[%s204 + $0x3c] sm:$0xf] %v581
        %s614 = sand.u32 %s117, 1
        %s615 = scalar_lea.sflag [#allocation3], %s614
        %s616 = sand.u32 %s117, 1
        %s617 = smul.addr %s616, 64
        %s618 = scalar_lea.vmem [#allocation2], %s617
        // Predicated region
        $region33: #{tpu_custom_call.1} parent=31 // pred_check
          %p619 = pneg %p127
        $region34: #{tpu_custom_call.1} parent=31 // pred_check_branch
          %621 = sbr.rel (%p619) target = $region36
        $region35: #{tpu_custom_call.1} parent=31 // pred_region
          %s622 = smul.u32 16, %s21
          %s624 = ssub.s32 1024, 1024
          %625 = vsyncadd %s615, %s624
          %s626 = sadd.s32 %s22, %s622
          %s627 = smul.addr %s626, 64
          %s628 = scalar_lea.hbm %s3, %s627
          %s629 = sshll.u32 %s618, 4
          %s630 = int_to_ptr.vmem [resolvable:$true] %s629
          %635 = dma.vmem_to_hbm [thread:$0]  %s630, 1024, %s628, %s615, 64, 64, 4
        $region36: #{tpu_custom_call.1} parent=31 // pred_fallthru
          _
      $region32: #{tpu_custom_call.1} parent=5 // pred_fallthru
        _
      %p636 = scmp.le.s32.totalorder 2, %s12
      // Predicated region
      $region37: #{tpu_custom_call.1} parent=5 // pred_check
        %p637 = pneg %p636
      $region38: #{tpu_custom_call.1} parent=5 // pred_check_branch
        %639 = sbr.rel (%p637) target = $region40
      $region39: #{tpu_custom_call.1} parent=5 // pred_region
        %s640 = ssub.s32 %s12, 2
        // Predicated region
        $region41: #{tpu_custom_call.1} parent=39 // pred_check
          %p641 = pneg %p133
        $region42: #{tpu_custom_call.1} parent=39 // pred_check_branch
          %643 = sbr.rel (%p641) target = $region44
        $region43: #{tpu_custom_call.1} parent=39 // pred_region
          %s644 = sand.u32 %s118, 1
          %s645 = scalar_lea.sflag [#allocation3], %s644
          %s646 = sand.u32 %s118, 1
          %s647 = smul.addr %s646, 64
          %s648 = scalar_lea.vmem [#allocation2], %s647
          %649 = dma.done %s645, 1024
        $region44: #{tpu_custom_call.1} parent=39 // pred_fallthru
          _
      $region40: #{tpu_custom_call.1} parent=5 // pred_fallthru
        _
    $region6: #{tpu_custom_call.1} parent=1 // loop_footer
      %s16 = sadd.s32 1, %s12
    $region7: #{tpu_custom_call.1} parent=1 // loop_footer_branch
      %11 = sbr.rel target = $region3
    $region8: #{tpu_custom_call.1} parent=1 // loop_exit
      _
    %650 = vsyncpa [#allocation3], 1
    %s651 = scalar_lea.sflag [#allocation3], 1
    %652 = vsyncpa %s651, 1

</llo_original>
